<compile_context>
chip_gen: v6e
topology: v6e:2x2x1
jax: 0.10.0
libtpu: 0.0.40
codegen_flags: <defaults>
</compile_context>

<pallas_src>
import jax
import jax.numpy as jnp
from jax.experimental import pallas as pl
from jax.experimental.pallas import tpu as pltpu


def _round_up(x, m):
    return (x + m - 1) // m * m


def lmembed_kernel(ids_ref, hlm_ref, w_ref, emb_ref, b_ref, out_ref):
    # ids_ref : (TM, 1)          int32   token ids for this row-tile (streamed)
    # hlm_ref : (TM, H)          bf16    lm.encode(x) hidden states (streamed)
    # w_ref   : (H, NOUT)        bf16    projection weight (VMEM-resident)
    # emb_ref : (NIN_PAD, NOUT)  bf16    embedding table, rows padded to 128 (resident)
    # b_ref   : (1, NOUT)        f32     projection bias (resident)
    # out_ref : (TM, NOUT)       f32
    tm = hlm_ref.shape[0]
    nin_pad = emb_ref.shape[0]

    # Projection: h_lm @ W with f32 accumulation on the MXU.
    acc = jnp.dot(hlm_ref[...], w_ref[...], preferred_element_type=jnp.float32)

    # Embedding gather as a one-hot matmul over a lane-aligned nin_pad window.
    # bool -> bf16 convert is exact; no bf16 elementwise adds (v5e-friendly).
    col = jax.lax.broadcasted_iota(jnp.int32, (tm, nin_pad), 1)
    onehot = (col == ids_ref[...]).astype(emb_ref.dtype)           # (TM, NIN_PAD)
    acc = acc + jnp.dot(onehot, emb_ref[...], preferred_element_type=jnp.float32)

    # bias + transform (ReLU); NOUT=128 keeps the store lane-dense/unmasked.
    acc = acc + b_ref[...]
    out_ref[...] = jnp.maximum(acc, 0.0).astype(out_ref.dtype)


def lmembed_forward(x_ids, h_lm, embed_table, proj_w, proj_b, *,
                    tm=None, compute_dtype=jnp.bfloat16, out_dtype=jnp.float32):
    """x_ids: (B, T) int; h_lm: (B, T, H) -> (B, T, NOUT) in out_dtype."""
    B, T = x_ids.shape
    H = h_lm.shape[-1]
    nin, nout = embed_table.shape
    assert proj_w.shape == (H, nout)
    N = B * T

    # Row-tile size: as large as possible (amortize per-step pipeline overhead)
    # while keeping at least 2 grid steps so v7x's two TensorCores both get
    # work through the "parallel" grid axis.  Cap keeps tiles ~<=1 MiB.
    if tm is None:
        tm = max(8, min(1024, _round_up(pl.cdiv(N, 2), 8)))
    else:
        tm = max(8, _round_up(int(tm), 8))
    grid = (pl.cdiv(N, tm),)

    # Streamed operands: reshape is free; the cast is a no-op when the LM
    # encoder already emits compute_dtype (the usual bf16 case).
    ids_flat = x_ids.reshape(N, 1).astype(jnp.int32)
    hlm_flat = h_lm.reshape(N, H).astype(compute_dtype)

    # Resident operands (DMA'd once via constant index_map, stay in VMEM).
    nin_pad = _round_up(nin, 128)                     # lane-aligned one-hot window
    emb_pad = jnp.zeros((nin_pad, nout), compute_dtype)
    emb_pad = emb_pad.at[:nin].set(embed_table.astype(compute_dtype))
    proj_wc = proj_w.astype(compute_dtype)
    bias2d = proj_b.reshape(1, nout).astype(jnp.float32)

    # VMEM budget: resident weights + double-buffered streamed tiles.
    citem = jnp.dtype(compute_dtype).itemsize
    oitem = jnp.dtype(out_dtype).itemsize
    resident_bytes = (nin_pad + H) * nout * citem + nout * 4
    per_step_bytes = tm * (H * citem + 128 * 4 + nout * oitem)  # hlm + ids(lane-padded) + out
    vmem_need = resident_bytes + 2 * per_step_bytes
    assert resident_bytes <= 8 * 2**20, (
        "vocab too large for the resident one-hot path; use a row-gather kernel")
    vmem_limit = (int(min(vmem_need * 5 // 4, 60 * 2**20))
                  if vmem_need > 28 * 2**20 else None)

    out_flat = pl.pallas_call(
        lmembed_kernel,
        out_shape=jax.ShapeDtypeStruct((N, nout), out_dtype),
        grid_spec=pltpu.PrefetchScalarGridSpec(
            num_scalar_prefetch=0,
            grid=grid,
            in_specs=[
                pl.BlockSpec((tm, 1), lambda i: (i, 0)),          # ids (streamed)
                pl.BlockSpec((tm, H), lambda i: (i, 0)),          # h_lm (streamed)
                pl.BlockSpec((H, nout), lambda i: (0, 0)),        # proj W (resident)
                pl.BlockSpec((nin_pad, nout), lambda i: (0, 0)),  # embed table (resident)
                pl.BlockSpec((1, nout), lambda i: (0, 0)),        # bias (resident)
            ],
            out_specs=pl.BlockSpec((tm, nout), lambda i: (i, 0)),
        ),
        compiler_params=pltpu.CompilerParams(
            dimension_semantics=("parallel",),
            vmem_limit_bytes=vmem_limit),
    )(ids_flat, hlm_flat, proj_wc, emb_pad, bias2d)

    return out_flat.reshape(B, T, nout)


def reference_forward(x_ids, h_lm, embed_table, proj_w, proj_b):
    h = embed_table[x_ids]                        # (B, T, NOUT) gather
    h_lm_p = h_lm @ proj_w + proj_b               # (B, T, NOUT) projection
    return jnp.maximum(h + h_lm_p, 0.0)           # transform = ReLU


if __name__ == "__main__":
    # Small shapes consistent with the module:
    B, T = 2, 8          # batch, sequence length
    NIN = 32             # vocab size (padding_idx = NIN - 1)
    NOUT = 128           # embedding / output dim
    HIDDEN = 64          # lm.hidden_size()

    key = jax.random.PRNGKey(0)
    k_emb, k_w, k_b, k_ids, k_hlm = jax.random.split(key, 5)

    # Deterministic parameter init (embedding padding row zeroed, like PyTorch).
    embed_table = jax.random.normal(k_emb, (NIN, NOUT), jnp.float32) * 0.02
    embed_table = embed_table.at[NIN - 1].set(0.0)          # padding_idx = nin - 1
    proj_w = jax.random.normal(k_w, (HIDDEN, NOUT), jnp.float32) * 0.05
    proj_b = jax.random.normal(k_b, (NOUT,), jnp.float32) * 0.01

    # Inputs: token ids + synthetic LM hidden states (stand-in for lm.encode),
    # produced directly in bf16 as a bf16 LM encoder would.
    x_ids = jax.random.randint(k_ids, (B, T), 0, NIN, dtype=jnp.int32)
    h_lm = jax.random.normal(k_hlm, (B, T, HIDDEN), jnp.float32).astype(jnp.bfloat16)

    out = lmembed_forward(x_ids, h_lm, embed_table, proj_w, proj_b)
    out = jax.block_until_ready(out)

    ref = reference_forward(x_ids, h_lm.astype(jnp.float32),
                            embed_table, proj_w, proj_b)
    assert out.shape == (B, T, NOUT)
    # bf16 operands (f32 accumulation) -> slightly looser tolerance than f32.
    assert jnp.allclose(out, ref, atol=1e-2, rtol=1e-2), \
        float(jnp.max(jnp.abs(out - ref)))

    print("KERNEL_OK")
</pallas_src>

<mosaic_0001>
module attributes {stable_mosaic.version = 11 : i64} {
  func.func @lmembed_kernel(%arg0: i32, %arg1: memref<8x1xi32, #tpu.memory_space<vmem>>, %arg2: memref<8x64xbf16, #tpu.memory_space<vmem>>, %arg3: memref<64x128xbf16, #tpu.memory_space<vmem>>, %arg4: memref<128x128xbf16, #tpu.memory_space<vmem>>, %arg5: memref<1x128xf32, #tpu.memory_space<vmem>>, %arg6: memref<8x128xf32, #tpu.memory_space<vmem>>) attributes {dimension_semantics = [#tpu.dimension_semantics<parallel>], iteration_bounds = array<i64: 2>, scalar_prefetch = 0 : i64, scratch_operands = 0 : i64, tpu.core_type = #tpu.core_type<tc>, window_params = [{transform_indices = @transform_0, window_bounds = array<i64: 8, 1>}, {transform_indices = @transform_1, window_bounds = array<i64: 8, 64>}, {pipeline_mode = #tpu.pipeline_mode<synchronous>, transform_indices = @transform_2, window_bounds = array<i64: 64, 128>}, {pipeline_mode = #tpu.pipeline_mode<synchronous>, transform_indices = @transform_3, window_bounds = array<i64: 128, 128>}, {pipeline_mode = #tpu.pipeline_mode<synchronous>, transform_indices = @transform_4, window_bounds = array<i64: 1, 128>}, {transform_indices = @transform_5, window_bounds = array<i64: 8, 128>}]} {
    %c0 = arith.constant 0 : index
    %c0_0 = arith.constant 0 : index
    %0 = vector.load %arg2[%c0, %c0_0] : memref<8x64xbf16, #tpu.memory_space<vmem>>, vector<8x64xbf16>
    %c0_1 = arith.constant 0 : index
    %c0_2 = arith.constant 0 : index
    %1 = vector.load %arg3[%c0_1, %c0_2] : memref<64x128xbf16, #tpu.memory_space<vmem>>, vector<64x128xbf16>
    %cst = arith.constant dense<0.000000e+00> : vector<8x128xf32>
    %2 = tpu.matmul %0, %1, %cst {dimension_numbers = #tpu.dot_dimension_numbers<[1], [0], [0], [1], [0, 0, 1, 1], [], []>} : vector<8x64xbf16>, vector<64x128xbf16>, vector<8x128xf32> -> vector<8x128xf32>
    %3 = tpu.iota {dimensions = array<i32: 1>} : vector<8x128xi32>
    %c0_3 = arith.constant 0 : index
    %c0_4 = arith.constant 0 : index
    %4 = vector.load %arg1[%c0_3, %c0_4] : memref<8x1xi32, #tpu.memory_space<vmem>>, vector<8x1xi32>
    %5 = vector.broadcast %4 : vector<8x1xi32> to vector<8x128xi32>
    %6 = arith.cmpi eq, %3, %5 : vector<8x128xi32>
    %7 = arith.extui %6 : vector<8x128xi1> to vector<8x128xi32>
    %8 = arith.sitofp %7 : vector<8x128xi32> to vector<8x128xf32>
    %9 = arith.truncf %8 : vector<8x128xf32> to vector<8x128xbf16>
    %c0_5 = arith.constant 0 : index
    %c0_6 = arith.constant 0 : index
    %10 = vector.load %arg4[%c0_5, %c0_6] : memref<128x128xbf16, #tpu.memory_space<vmem>>, vector<128x128xbf16>
    %cst_7 = arith.constant dense<0.000000e+00> : vector<8x128xf32>
    %11 = tpu.matmul %9, %10, %cst_7 {dimension_numbers = #tpu.dot_dimension_numbers<[1], [0], [0], [1], [0, 0, 1, 1], [], []>} : vector<8x128xbf16>, vector<128x128xbf16>, vector<8x128xf32> -> vector<8x128xf32>
    %12 = arith.addf %2, %11 : vector<8x128xf32>
    %c0_8 = arith.constant 0 : index
    %c0_9 = arith.constant 0 : index
    %13 = vector.load %arg5[%c0_8, %c0_9] : memref<1x128xf32, #tpu.memory_space<vmem>>, vector<1x128xf32>
    %14 = vector.broadcast %13 : vector<1x128xf32> to vector<8x128xf32>
    %15 = arith.addf %12, %14 : vector<8x128xf32>
    %cst_10 = arith.constant 0.000000e+00 : f32
    %16 = vector.broadcast %cst_10 : f32 to vector<8x128xf32>
    %17 = arith.maximumf %15, %16 : vector<8x128xf32>
    %c0_11 = arith.constant 0 : index
    %c0_12 = arith.constant 0 : index
    %18 = vector.load %arg6[%c0_11, %c0_12] : memref<8x128xf32, #tpu.memory_space<vmem>>, vector<8x128xf32>
    tpu.vector_store %arg6[%c0_11, %c0_12], %17 {strides = array<i32>} : memref<8x128xf32, #tpu.memory_space<vmem>>, vector<8x128xf32>,
    return
  }
  func.func @transform_0(%arg0: i32) -> (i32, i32) {
    %c0_i32 = arith.constant 0 : i32
    %c0_i32_0 = arith.constant 0 : i32
    return %arg0, %c0_i32 : i32, i32
  }
  func.func @transform_1(%arg0: i32) -> (i32, i32) {
    %c0_i32 = arith.constant 0 : i32
    %c0_i32_0 = arith.constant 0 : i32
    return %arg0, %c0_i32 : i32, i32
  }
  func.func @transform_2(%arg0: i32) -> (i32, i32) {
    %c0_i32 = arith.constant 0 : i32
    %c0_i32_0 = arith.constant 0 : i32
    %c0_i32_1 = arith.constant 0 : i32
    return %c0_i32, %c0_i32_0 : i32, i32
  }
  func.func @transform_3(%arg0: i32) -> (i32, i32) {
    %c0_i32 = arith.constant 0 : i32
    %c0_i32_0 = arith.constant 0 : i32
    %c0_i32_1 = arith.constant 0 : i32
    return %c0_i32, %c0_i32_0 : i32, i32
  }
  func.func @transform_4(%arg0: i32) -> (i32, i32) {
    %c0_i32 = arith.constant 0 : i32
    %c0_i32_0 = arith.constant 0 : i32
    %c0_i32_1 = arith.constant 0 : i32
    return %c0_i32, %c0_i32_0 : i32, i32
  }
  func.func @transform_5(%arg0: i32) -> (i32, i32) {
    %c0_i32 = arith.constant 0 : i32
    %c0_i32_0 = arith.constant 0 : i32
    return %arg0, %c0_i32 : i32, i32
  }
}

</mosaic_0001>

<llo_original>
// kernel: tpu_custom_call.1
$region0: #{tpu_custom_call.1}
  #allocation0 [shape = 'u32[]', space=smem, size = 0x4, offset = 0x4, fixed_abs, tag = 'smem constant byte address 0x4 - core index']
  #allocation1 [shape = 'u32[144,128]{1,0:T(1,128)}', space=vmem, size = 0x12000, scoped, tag = 'internal scratch']
  %s0 = inlined_call_operand.vmem [shape: s32[16,1], index: 0, kind: input, shape index: {}]
  %s1 = inlined_call_operand.vmem [shape: bf16[16,64], index: 1, kind: input, shape index: {}]
  %s2 = inlined_call_operand.hbm [shape: bf16[64,128], index: 2, kind: input, shape index: {}]
  %s3 = inlined_call_operand.hbm [shape: bf16[128,128], index: 3, kind: input, shape index: {}]
  %s4 = inlined_call_operand.vmem [shape: f32[1,128], index: 4, kind: input, shape index: {}]
  %s5 = inlined_call_operand.hbm [shape: f32[16,128], index: 5, kind: output, shape index: {}]
  %s6 = sld [smem:[#allocation0]]
  $region61: #{tpu_custom_call.1} parent=0
    _
  %s8 = ssub.s32 1, %s6
  %s9 = scalar_select 0, %s8, %s6
  $region1: #{tpu_custom_call.1} parent=0
    #allocation2 [shape = 'u8[16384]{0}', space=vmem, size = 0x4000, scoped, tag = 'input window, operand 2, single buffered']
    #allocation3 [shape = 's32[2]{0}', space=sflag, size = 0x8, scoped, tag = 'scoped memory for tpu_custom_call.1']
    #allocation4 [shape = 's32[2]{0}', space=sflag, size = 0x8, scoped, tag = 'scoped memory for tpu_custom_call.1']
    #allocation5 [shape = 'u8[32768]{0}', space=vmem, size = 0x8000, scoped, tag = 'input window, operand 3, single buffered']
    #allocation6 [shape = 's32[1]{0}', space=sflag, size = 0x4, scoped, tag = 'scoped memory for tpu_custom_call.1']
    #allocation7 [shape = 'u8[8192]{0}', space=vmem, size = 0x2000, scoped, tag = 'output window, operand 0']
    %10 = vsyncpa [#allocation3], 0
    %11 = vsyncpa [#allocation6], 0
    %12 = vsyncpa [#allocation4], 0
    %s13 = scalar_lea.sflag [#allocation4], 1
    %14 = vsyncpa %s13, 0
    loop: start=0, step=1, limit=4
    $region2: #{tpu_custom_call.1} parent=1 // loop_pre_header
      _
    $region3: #{tpu_custom_call.1} parent=1 // loop_header
      %s16 = sphi 0, %s20
      %p17 = scmp.ge.s32.totalorder %s16, 4
      %s26 = sphi 0, %s28
      %s29 = sphi 0, %s26
      %s30 = sphi 0, %s29
      %s46 = sphi 0, %s30
      %s52 = sphi 0, %s54
      %s55 = sphi 0, %s52
      %s56 = sphi 0, %s55
      %s72 = sphi 0, %s56
      %s76 = sphi 0, %s76
      %s78 = sphi 0, %s76
      %s79 = sphi 0, %s78
      %s93 = sphi 0, %s79
      %s97 = sphi 0, %s97
      %s99 = sphi 0, %s97
      %s100 = sphi 0, %s99
      %s114 = sphi 0, %s100
      %s118 = sphi 0, %s118
      %s120 = sphi 0, %s118
      %s121 = sphi 0, %s120
      %s135 = sphi 0, %s121
      %s141 = sphi 0, %s143
      %s144 = sphi 0, %s141
      %s145 = sphi 0, %s144
      %s161 = sphi 0, %s145
    $region4: #{tpu_custom_call.1} parent=1 // loop_header_branch
      %19 = sbr.rel (%p17) target = $region8
    $region5: #{tpu_custom_call.1} parent=1 // loop_body
      %s21 = ssub.s32 %s16, 1
      %s22 = ssub.s32 %s16, 2
      %s23 = sadd.s32 %s16, 1
      %s24 = ssub.s32 %s16, %s23
      %p25 = scmp.eq.s32.totalorder %s24, 0
      %s27 = sadd.s32 %s26, 1
      %s28 = scalar_select %p25, %s26, %s27
      %p31 = pneg %p25
      %p32 = scmp.eq.s32.totalorder %s16, 1
      %p33 = por %p31, %p32
      %p34 = scmp.ne.s32.totalorder %s26, %s29
      %p35 = scmp.eq.s32.totalorder %s16, 0
      %p36 = por %p34, %p35
      %p37 = scmp.ne.s32.totalorder %s26, %s29
      %p38 = scmp.eq.s32.totalorder %s21, 1
      %p39 = por %p37, %p38
      %p40 = scmp.ne.s32.totalorder %s29, %s30
      %p41 = scmp.eq.s32.totalorder %s21, 0
      %p42 = por %p40, %p41
      %p43 = scmp.ne.s32.totalorder %s29, %s30
      %p44 = scmp.eq.s32.totalorder %s22, 1
      %p45 = por %p43, %p44
      %p47 = scmp.ne.s32.totalorder %s30, %s46
      %p48 = scmp.eq.s32.totalorder %s22, 0
      %p49 = por %p47, %p48
      %s50 = ssub.s32 %s16, %s23
      %p51 = scmp.eq.s32.totalorder %s50, 0
      %s53 = sadd.s32 %s52, 1
      %s54 = scalar_select %p51, %s52, %s53
      %p57 = pneg %p51
      %p58 = scmp.eq.s32.totalorder %s16, 1
      %p59 = por %p57, %p58
      %p60 = scmp.ne.s32.totalorder %s52, %s55
      %p61 = scmp.eq.s32.totalorder %s16, 0
      %p62 = por %p60, %p61
      %p63 = scmp.ne.s32.totalorder %s52, %s55
      %p64 = scmp.eq.s32.totalorder %s21, 1
      %p65 = por %p63, %p64
      %p66 = scmp.ne.s32.totalorder %s55, %s56
      %p67 = scmp.eq.s32.totalorder %s21, 0
      %p68 = por %p66, %p67
      %p69 = scmp.ne.s32.totalorder %s55, %s56
      %p70 = scmp.eq.s32.totalorder %s22, 1
      %p71 = por %p69, %p70
      %p73 = scmp.ne.s32.totalorder %s56, %s72
      %p74 = scmp.eq.s32.totalorder %s22, 0
      %p75 = por %p73, %p74
      %s77 = sadd.s32 %s76, 1
      %p80 = scmp.eq.s32.totalorder %s16, 1
      %p81 = scmp.ne.s32.totalorder %s76, %s78
      %p82 = scmp.eq.s32.totalorder %s16, 0
      %p83 = por %p81, %p82
      %p84 = scmp.ne.s32.totalorder %s76, %s78
      %p85 = scmp.eq.s32.totalorder %s21, 1
      %p86 = por %p84, %p85
      %p87 = scmp.ne.s32.totalorder %s78, %s79
      %p88 = scmp.eq.s32.totalorder %s21, 0
      %p89 = por %p87, %p88
      %p90 = scmp.ne.s32.totalorder %s78, %s79
      %p91 = scmp.eq.s32.totalorder %s22, 1
      %p92 = por %p90, %p91
      %p94 = scmp.ne.s32.totalorder %s79, %s93
      %p95 = scmp.eq.s32.totalorder %s22, 0
      %p96 = por %p94, %p95
      %s98 = sadd.s32 %s97, 1
      %p101 = scmp.eq.s32.totalorder %s16, 1
      %p102 = scmp.ne.s32.totalorder %s97, %s99
      %p103 = scmp.eq.s32.totalorder %s16, 0
      %p104 = por %p102, %p103
      %p105 = scmp.ne.s32.totalorder %s97, %s99
      %p106 = scmp.eq.s32.totalorder %s21, 1
      %p107 = por %p105, %p106
      %p108 = scmp.ne.s32.totalorder %s99, %s100
      %p109 = scmp.eq.s32.totalorder %s21, 0
      %p110 = por %p108, %p109
      %p111 = scmp.ne.s32.totalorder %s99, %s100
      %p112 = scmp.eq.s32.totalorder %s22, 1
      %p113 = por %p111, %p112
      %p115 = scmp.ne.s32.totalorder %s100, %s114
      %p116 = scmp.eq.s32.totalorder %s22, 0
      %p117 = por %p115, %p116
      %s119 = sadd.s32 %s118, 1
      %p122 = scmp.eq.s32.totalorder %s16, 1
      %p123 = scmp.ne.s32.totalorder %s118, %s120
      %p124 = scmp.eq.s32.totalorder %s16, 0
      %p125 = por %p123, %p124
      %p126 = scmp.ne.s32.totalorder %s118, %s120
      %p127 = scmp.eq.s32.totalorder %s21, 1
      %p128 = por %p126, %p127
      %p129 = scmp.ne.s32.totalorder %s120, %s121
      %p130 = scmp.eq.s32.totalorder %s21, 0
      %p131 = por %p129, %p130
      %p132 = scmp.ne.s32.totalorder %s120, %s121
      %p133 = scmp.eq.s32.totalorder %s22, 1
      %p134 = por %p132, %p133
      %p136 = scmp.ne.s32.totalorder %s121, %s135
      %p137 = scmp.eq.s32.totalorder %s22, 0
      %p138 = por %p136, %p137
      %s139 = ssub.s32 %s16, %s23
      %p140 = scmp.eq.s32.totalorder %s139, 0
      %s142 = sadd.s32 %s141, 1
      %s143 = scalar_select %p140, %s141, %s142
      %p146 = pneg %p140
      %p147 = scmp.eq.s32.totalorder %s16, 1
      %p148 = por %p146, %p147
      %p149 = scmp.ne.s32.totalorder %s141, %s144
      %p150 = scmp.eq.s32.totalorder %s16, 0
      %p151 = por %p149, %p150
      %p152 = scmp.ne.s32.totalorder %s141, %s144
      %p153 = scmp.eq.s32.totalorder %s21, 1
      %p154 = por %p152, %p153
      %p155 = scmp.ne.s32.totalorder %s144, %s145
      %p156 = scmp.eq.s32.totalorder %s21, 0
      %p157 = por %p155, %p156
      %p158 = scmp.ne.s32.totalorder %s144, %s145
      %p159 = scmp.eq.s32.totalorder %s22, 1
      %p160 = por %p158, %p159
      %p162 = scmp.ne.s32.totalorder %s145, %s161
      %p163 = scmp.eq.s32.totalorder %s22, 0
      %p164 = por %p162, %p163
      %p165 = scmp.le.s32.totalorder 1, %s16
      %p166 = scmp.lt.s32.totalorder %s16, 3
      %p167 = pnand %p165, %p166
      %p168 = pneg %p167
      // Predicated region
      $region9: #{tpu_custom_call.1} parent=5 // pred_check
        _
      $region10: #{tpu_custom_call.1} parent=5 // pred_check_branch
        %170 = sbr.rel (%p167) target = $region12
      $region11: #{tpu_custom_call.1} parent=5 // pred_region
        %s171 = ssub.s32 %s16, 1
        // Predicated region
        $region13: #{tpu_custom_call.1} parent=11 // pred_check
          %p172 = pneg %p89
        $region14: #{tpu_custom_call.1} parent=11 // pred_check_branch
          %174 = sbr.rel (%p172) target = $region16
        $region15: #{tpu_custom_call.1} parent=11 // pred_region
          %s176 = ssub.s32 512, 512
          %177 = vsyncadd [#allocation3], %s176
          %s178 = sshll.u32 [#allocation2], 4
          %s179 = int_to_ptr.vmem [resolvable:$true] %s178
          %184 = dma.hbm_to_vmem [thread:$0]  %s2, 512, %s179, [#allocation3], 64, 64, 4
        $region16: #{tpu_custom_call.1} parent=11 // pred_fallthru
          _
        // Predicated region
        $region17: #{tpu_custom_call.1} parent=11 // pred_check
          %p185 = pneg %p110
        $region18: #{tpu_custom_call.1} parent=11 // pred_check_branch
          %187 = sbr.rel (%p185) target = $region20
        $region19: #{tpu_custom_call.1} parent=11 // pred_region
          %s189 = ssub.s32 1024, 1024
          %190 = vsyncadd [#allocation6], %s189
          %s191 = sshll.u32 [#allocation5], 4
          %s192 = int_to_ptr.vmem [resolvable:$true] %s191
          %197 = dma.hbm_to_vmem [thread:$0]  %s3, 1024, %s192, [#allocation6], 64, 64, 4
        $region20: #{tpu_custom_call.1} parent=11 // pred_fallthru
          _
        // Predicated region
        $region21: #{tpu_custom_call.1} parent=11 // pred_check
          %p198 = pneg %p131
        $region22: #{tpu_custom_call.1} parent=11 // pred_check_branch
          %200 = sbr.rel (%p198) target = $region24
        $region23: #{tpu_custom_call.1} parent=11 // pred_region
          _
        $region24: #{tpu_custom_call.1} parent=11 // pred_fallthru
          _
      $region12: #{tpu_custom_call.1} parent=5 // pred_fallthru
        _
      %p201 = scmp.lt.s32.totalorder %s16, 2
      // Predicated region
      $region25: #{tpu_custom_call.1} parent=5 // pred_check
        %p202 = pneg %p201
      $region26: #{tpu_custom_call.1} parent=5 // pred_check_branch
        %204 = sbr.rel (%p202) target = $region28
      $region27: #{tpu_custom_call.1} parent=5 // pred_region
        // Predicated region
        $region29: #{tpu_custom_call.1} parent=27 // pred_check
          %p205 = pneg %p36
        $region30: #{tpu_custom_call.1} parent=27 // pred_check_branch
          %207 = sbr.rel (%p205) target = $region32
        $region31: #{tpu_custom_call.1} parent=27 // pred_region
          %p208 = scmp.lt.s32.totalorder %s16, 1
          %s209 = scalar_select %p208, %s16, 1
          %s210 = smul.addr %s209, 8
          %s211 = scalar_lea.vmem %s0, %s210
        $region32: #{tpu_custom_call.1} parent=27 // pred_fallthru
          _
        // Predicated region
        $region33: #{tpu_custom_call.1} parent=27 // pred_check
          %p212 = pneg %p62
        $region34: #{tpu_custom_call.1} parent=27 // pred_check_branch
          %214 = sbr.rel (%p212) target = $region36
        $region35: #{tpu_custom_call.1} parent=27 // pred_region
          %p215 = scmp.lt.s32.totalorder %s16, 1
          %s216 = scalar_select %p215, %s16, 1
          %s217 = smul.addr %s216, 4
          %s218 = scalar_lea.vmem %s1, %s217
        $region36: #{tpu_custom_call.1} parent=27 // pred_fallthru
          _
      $region28: #{tpu_custom_call.1} parent=5 // pred_fallthru
        _
      %p219 = scmp.le.s32.totalorder 1, %s16
      %p220 = scmp.lt.s32.totalorder %s16, 3
      %p221 = pnand %p219, %p220
      %p222 = pneg %p221
      // Predicated region
      $region37: #{tpu_custom_call.1} parent=5 // pred_check
        _
      $region38: #{tpu_custom_call.1} parent=5 // pred_check_branch
        %224 = sbr.rel (%p221) target = $region40
      $region39: #{tpu_custom_call.1} parent=5 // pred_region
        %s225 = ssub.s32 %s16, 1
        // Predicated region
        $region41: #{tpu_custom_call.1} parent=39 // pred_check
          %p226 = pneg %p89
        $region42: #{tpu_custom_call.1} parent=39 // pred_check_branch
          %228 = sbr.rel (%p226) target = $region44
        $region43: #{tpu_custom_call.1} parent=39 // pred_region
          %229 = dma.done [#allocation3], 512
        $region44: #{tpu_custom_call.1} parent=39 // pred_fallthru
          _
        // Predicated region
        $region45: #{tpu_custom_call.1} parent=39 // pred_check
          %p230 = pneg %p110
        $region46: #{tpu_custom_call.1} parent=39 // pred_check_branch
          %232 = sbr.rel (%p230) target = $region48
        $region47: #{tpu_custom_call.1} parent=39 // pred_region
          %233 = dma.done [#allocation6], 1024
        $region48: #{tpu_custom_call.1} parent=39 // pred_fallthru
          _
        %p234 = scmp.lt.s32.totalorder %s21, 1
        %s235 = scalar_select %p234, %s21, 1
        %s236 = smul.addr %s235, 8
        %s237 = scalar_lea.vmem %s0, %s236
        %p238 = pneg %p42
        %p239 = pneg %p39
        %p240 = scmp.lt.s32.totalorder %s21, 1
        %s241 = scalar_select %p240, %s21, 1
        %s242 = smul.addr %s241, 4
        %s243 = scalar_lea.vmem %s1, %s242
        %p244 = pneg %p68
        %p245 = pneg %p65
        %p246 = pneg %p89
        %p247 = pneg %p86
        %p248 = pneg %p110
        %p249 = pneg %p107
        %p250 = pneg %p131
        %p251 = pneg %p128
        %p252 = pneg %p157
        %p253 = pneg %p154
        %s254 = sand.u32 %s144, 1
        %s255 = scalar_lea.sflag [#allocation4], %s254
        %s256 = sand.u32 %s144, 1
        %s257 = smul.addr %s256, 8
        %s258 = scalar_lea.vmem [#allocation7], %s257
        %p259 = scmp.lt.s32.totalorder %s21, 1
        %s260 = scalar_select %p259, %s21, 1
        %s261 = smul.addr %s260, 8
        %s262 = scalar_lea.vmem %s0, %s261
        %p263 = scmp.lt.s32.totalorder %s21, 1
        %s264 = scalar_select %p263, %s21, 1
        %s265 = smul.addr %s264, 4
        %s266 = scalar_lea.vmem %s1, %s265
        %v268 = vld [vmem:[%s266] sm:$0xf]
        %v269 = vld [vmem:[#allocation2] sm:$0xf]
        %v270 = vld [vmem:[#allocation2 + $0x4] sm:$0xf]
        %v271 = vld [vmem:[#allocation2 + $0x8] sm:$0xf]
        %v272 = vld [vmem:[#allocation2 + $0xc] sm:$0xf]
        %v273 = vld [vmem:[#allocation2 + $0x10] sm:$0xf]
        %v274 = vld [vmem:[#allocation2 + $0x14] sm:$0xf]
        %v275 = vld [vmem:[#allocation2 + $0x18] sm:$0xf]
        %v276 = vld [vmem:[#allocation2 + $0x1c] sm:$0xf]
        %v277 = vlaneseq
        %v278 = vand.u32 %v277, 127
        %v279 = vld [vmem:[%s262] sm:$0xff]
        %280 = vset.pattern.permute.xlu0 0
        %281 = vperm.xlu0 %280, %v279
        %v282 = vpop.permute.xlu0 %281
        %vm283 = vcmp.eq.s32.totalorder %v278, %v282
        %v284 = vsel %vm283, 1, 0
        %v285 = vcvt.s32.f32 %v284
        %v286 = vpack.c.bf16 %v285, %v285
        %v287 = vld [vmem:[#allocation5] sm:$0xf]
        %v288 = vld [vmem:[#allocation5 + $0x4] sm:$0xf]
        %v289 = vld [vmem:[#allocation5 + $0x8] sm:$0xf]
        %v290 = vld [vmem:[#allocation5 + $0xc] sm:$0xf]
        %v291 = vld [vmem:[#allocation5 + $0x10] sm:$0xf]
        %v292 = vld [vmem:[#allocation5 + $0x14] sm:$0xf]
        %v293 = vld [vmem:[#allocation5 + $0x18] sm:$0xf]
        %v294 = vld [vmem:[#allocation5 + $0x1c] sm:$0xf]
        %v295 = vld [vmem:[#allocation5 + $0x20] sm:$0xf]
        %v296 = vld [vmem:[#allocation5 + $0x24] sm:$0xf]
        %v297 = vld [vmem:[#allocation5 + $0x28] sm:$0xf]
        %v298 = vld [vmem:[#allocation5 + $0x2c] sm:$0xf]
        %v299 = vld [vmem:[#allocation5 + $0x30] sm:$0xf]
        %v300 = vld [vmem:[#allocation5 + $0x34] sm:$0xf]
        %v301 = vld [vmem:[#allocation5 + $0x38] sm:$0xf]
        %v302 = vld [vmem:[#allocation5 + $0x3c] sm:$0xf]
        %v319 = vunpack.c.l.b16 %v287
        %v320 = vunpack.c.l.b16 %v288
        %v321 = vunpack.c.l.b16 %v289
        %v322 = vunpack.c.l.b16 %v290
        %v323 = vunpack.c.l.b16 %v291
        %v324 = vunpack.c.l.b16 %v292
        %v325 = vunpack.c.l.b16 %v293
        %v326 = vunpack.c.l.b16 %v294
        %v327 = vunpack.c.l.b16 %v295
        %v328 = vunpack.c.l.b16 %v296
        %v329 = vunpack.c.l.b16 %v297
        %v330 = vunpack.c.l.b16 %v298
        %v331 = vunpack.c.l.b16 %v299
        %v332 = vunpack.c.l.b16 %v300
        %v333 = vunpack.c.l.b16 %v301
        %v334 = vunpack.c.l.b16 %v302
        %v335 = vpack.c.b16 %v320, %v319
        %v336 = vpack.c.b16 %v322, %v321
        %v337 = vpack.c.b16 %v324, %v323
        %v338 = vpack.c.b16 %v326, %v325
        %v339 = vpack.c.b16 %v328, %v327
        %v340 = vpack.c.b16 %v330, %v329
        %v341 = vpack.c.b16 %v332, %v331
        %v342 = vpack.c.b16 %v334, %v333
        %351 = vmatprep.subr.bf16.mxu0 0
        %352 = vmatpush1.bf16.msra.mxu0 %v342
        %353 = vmatprep.subr.bf16.mxu0 0
        %354 = vmatpush1.bf16.msra.mxu0 %v341
        %355 = vmatprep.subr.bf16.mxu0 0
        %356 = vmatpush1.bf16.msra.mxu0 %v340
        %357 = vmatprep.subr.bf16.mxu0 0
        %358 = vmatpush1.bf16.msra.mxu0 %v339
        %359 = vmatprep.subr.bf16.mxu0 0
        %360 = vmatpush1.bf16.msra.mxu0 %v338
        %361 = vmatprep.subr.bf16.mxu0 0
        %362 = vmatpush1.bf16.msra.mxu0 %v337
        %363 = vmatprep.subr.bf16.mxu0 0
        %364 = vmatpush1.bf16.msra.mxu0 %v336
        %365 = vmatprep.subr.bf16.mxu0 0
        %366 = vmatpush1.bf16.msra.mxu0 %v335
        %367 = vmatprep.subr.bf16.mxu0 0
        %368 = vmatpush2.bf16.msra.mxu0 0
        %369 = vmatprep.subr.bf16.mxu0 0
        %370 = vmatpush2.bf16.msra.mxu0 0
        %371 = vmatprep.subr.bf16.mxu0 0
        %372 = vmatpush2.bf16.msra.mxu0 0
        %373 = vmatprep.subr.bf16.mxu0 0
        %374 = vmatpush2.bf16.msra.mxu0 0
        %375 = vmatprep.subr.bf16.mxu0 0
        %376 = vmatpush2.bf16.msra.mxu0 0
        %377 = vmatprep.subr.bf16.mxu0 0
        %378 = vmatpush2.bf16.msra.mxu0 0
        %379 = vmatprep.subr.bf16.mxu0 0
        %380 = vmatpush2.bf16.msra.mxu0 0
        %381 = vmatprep.subr.bf16.mxu0 0
        %382 = vmatpush2.bf16.msra.mxu0 0
        %383 = vmatprep.mubr.bf16.mxu0 0
        %384 = vmatmul.mubr.bf16.gmra.mxu0 %v286
        %v385 = vpop.f32.mrf.mxu0
        %v386 = vadd.f32 0.0, %v385
        %v387 = vpop.f32.mrf.mxu0
        %v388 = vpop.f32.mrf.mxu0
        %v389 = vpop.f32.mrf.mxu0
        %390 = vdwg.mxu0
        %v399 = vunpack.c.l.b16 %v269
        %v400 = vunpack.c.l.b16 %v270
        %v401 = vunpack.c.l.b16 %v271
        %v402 = vunpack.c.l.b16 %v272
        %v403 = vunpack.c.l.b16 %v273
        %v404 = vunpack.c.l.b16 %v274
        %v405 = vunpack.c.l.b16 %v275
        %v406 = vunpack.c.l.b16 %v276
        %v407 = vpack.c.b16 %v400, %v399
        %v408 = vpack.c.b16 %v402, %v401
        %v409 = vpack.c.b16 %v404, %v403
        %v410 = vpack.c.b16 %v406, %v405
        %vm415 = vcmask 523264
        %v417 = vsel %vm415, %v268, 0
        %419 = vmatprep.subr.bf16.mxu0 0
        %420 = vmatpush1.bf16.msra.mxu0 0
        %421 = vmatprep.subr.bf16.mxu0 0
        %422 = vmatpush1.bf16.msra.mxu0 0
        %423 = vmatprep.subr.bf16.mxu0 0
        %424 = vmatpush1.bf16.msra.mxu0 0
        %425 = vmatprep.subr.bf16.mxu0 0
        %426 = vmatpush1.bf16.msra.mxu0 0
        %427 = vmatprep.subr.bf16.mxu0 0
        %428 = vmatpush1.bf16.msra.mxu0 %v410
        %429 = vmatprep.subr.bf16.mxu0 0
        %430 = vmatpush1.bf16.msra.mxu0 %v409
        %431 = vmatprep.subr.bf16.mxu0 0
        %432 = vmatpush1.bf16.msra.mxu0 %v408
        %433 = vmatprep.subr.bf16.mxu0 0
        %434 = vmatpush1.bf16.msra.mxu0 %v407
        %435 = vmatprep.subr.bf16.mxu0 0
        %436 = vmatpush2.bf16.msra.mxu0 0
        %437 = vmatprep.subr.bf16.mxu0 0
        %438 = vmatpush2.bf16.msra.mxu0 0
        %439 = vmatprep.subr.bf16.mxu0 0
        %440 = vmatpush2.bf16.msra.mxu0 0
        %441 = vmatprep.subr.bf16.mxu0 0
        %442 = vmatpush2.bf16.msra.mxu0 0
        %443 = vmatprep.subr.bf16.mxu0 0
        %444 = vmatpush2.bf16.msra.mxu0 0
        %445 = vmatprep.subr.bf16.mxu0 0
        %446 = vmatpush2.bf16.msra.mxu0 0
        %447 = vmatprep.subr.bf16.mxu0 0
        %448 = vmatpush2.bf16.msra.mxu0 0
        %449 = vmatprep.subr.bf16.mxu0 0
        %450 = vmatpush2.bf16.msra.mxu0 0
        %451 = vmatprep.mubr.bf16.mxu0 0
        %452 = vmatmul.mubr.bf16.gmra.mxu0 %v417
        %v453 = vpop.f32.mrf.mxu0
        %v454 = vadd.f32 %v386, %v453
        %v455 = vpop.f32.mrf.mxu0
        %v456 = vpop.f32.mrf.mxu0
        %v457 = vpop.f32.mrf.mxu0
        %458 = vdwg.mxu0
        %v459 = vld [vmem:[%s4] sm:$0x1]
        %v461 = vlaneseq
        %v462 = vshrl.u32 %v461, 7
        %v463 = vsub.s32 0, %v462
        %v464 = vrot.slane %v459, %v463
        %v466 = vadd.f32 %v454, %v464
        %v467 = vmax.f32 %v466, 0.0
        %468 = vst [vmem:[%s258] sm:$0xff] %v467
        %s469 = sand.u32 %s144, 1
        %s470 = scalar_lea.sflag [#allocation4], %s469
        %s471 = sand.u32 %s144, 1
        %s472 = smul.addr %s471, 8
        %s473 = scalar_lea.vmem [#allocation7], %s472
        // Predicated region
        $region49: #{tpu_custom_call.1} parent=39 // pred_check
          %p474 = pneg %p154
        $region50: #{tpu_custom_call.1} parent=39 // pred_check_branch
          %476 = sbr.rel (%p474) target = $region52
        $region51: #{tpu_custom_call.1} parent=39 // pred_region
          %s478 = ssub.s32 128, 128
          %479 = vsyncadd %s470, %s478
          %s480 = smul.addr %s21, 128
          %s481 = scalar_lea.hbm %s5, %s480
          %s483 = sshll.u32 %s473, 4
          %s484 = int_to_ptr.vmem [resolvable:$true] %s483
          %486 = dma.vmem_to_hbm [thread:$0]  %s484, 128, %s481, %s470
        $region52: #{tpu_custom_call.1} parent=39 // pred_fallthru
          _
      $region40: #{tpu_custom_call.1} parent=5 // pred_fallthru
        _
      %p487 = scmp.le.s32.totalorder 2, %s16
      // Predicated region
      $region53: #{tpu_custom_call.1} parent=5 // pred_check
        %p488 = pneg %p487
      $region54: #{tpu_custom_call.1} parent=5 // pred_check_branch
        %490 = sbr.rel (%p488) target = $region56
      $region55: #{tpu_custom_call.1} parent=5 // pred_region
        %s491 = ssub.s32 %s16, 2
        // Predicated region
        $region57: #{tpu_custom_call.1} parent=55 // pred_check
          %p492 = pneg %p160
        $region58: #{tpu_custom_call.1} parent=55 // pred_check_branch
          %494 = sbr.rel (%p492) target = $region60
        $region59: #{tpu_custom_call.1} parent=55 // pred_region
          %s495 = sand.u32 %s145, 1
          %s496 = scalar_lea.sflag [#allocation4], %s495
          %s497 = sand.u32 %s145, 1
          %s498 = smul.addr %s497, 8
          %s499 = scalar_lea.vmem [#allocation7], %s498
          %500 = dma.done %s496, 128
        $region60: #{tpu_custom_call.1} parent=55 // pred_fallthru
          _
      $region56: #{tpu_custom_call.1} parent=5 // pred_fallthru
        _
    $region6: #{tpu_custom_call.1} parent=1 // loop_footer
      %s20 = sadd.s32 1, %s16
    $region7: #{tpu_custom_call.1} parent=1 // loop_footer_branch
      %15 = sbr.rel target = $region3
    $region8: #{tpu_custom_call.1} parent=1 // loop_exit
      _
    %501 = vsyncpa [#allocation3], 1
    %s502 = scalar_lea.sflag [#allocation3], 1
    %503 = vsyncpa %s502, 1
    %504 = vsyncpa [#allocation6], 1
    %505 = vsyncpa [#allocation4], 1
    %s506 = scalar_lea.sflag [#allocation4], 1
    %507 = vsyncpa %s506, 1

</llo_original>
